<compile_context>
chip_gen: v7x
topology: tpu7x:2x2x1
jax: 0.10.0
libtpu: 0.0.40
codegen_flags: <defaults>
</compile_context>

<pallas_src>
import jax
import jax.numpy as jnp
from jax.experimental import pallas as pl
from jax.experimental.pallas import tpu as pltpu

LANE = 128  # TPU lane width: feature dims are padded to this once, at init


def _round_up(x, m):
    return ((x + m - 1) // m) * m


def mlp_kernel(x_ref, w_ref, b_ref, o_ref):
    # x_ref: (TB, in_dim)          w_ref: (3, LANE, LANE) fused weight slab
    # b_ref: (8, LANE) bias slab   o_ref: (TB, out_dim)
    in_dim = x_ref.shape[-1]
    out_dim = o_ref.shape[-1]

    b = b_ref[...]
    b1 = b[0:1, :]
    b2 = b[1:2, :]
    b3 = b[2:3, :out_dim]

    # Layer 1: Linear(in_dim -> hidden) + ReLU.  Only the real K rows of the
    # padded w1 feed the MXU; padded hidden lanes stay exactly 0 (zero weight
    # columns / bias lanes) through ReLU, so they contribute nothing downstream.
    w1 = w_ref[0][:in_dim, :]
    h1 = jnp.dot(x_ref[...], w1, preferred_element_type=jnp.float32)
    h1 = jnp.maximum(h1 + b1, 0.0)

    # Layer 2: Linear(hidden -> hidden) + ReLU.
    h2 = jnp.dot(h1, w_ref[1], preferred_element_type=jnp.float32)
    h2 = jnp.maximum(h2 + b2, 0.0)

    # Layer 3: Linear(hidden -> out_dim); store only the real logit lanes.
    logits = jnp.dot(h2, w_ref[2], preferred_element_type=jnp.float32)
    o_ref[...] = (logits[:, :out_dim] + b3).astype(o_ref.dtype)


def prepare_params(params):
    """One-time padding / fusion of the 6 parameter arrays into 2 VMEM slabs.

    Call once (e.g. at init); the forward path then does no per-call padding.
    """
    w1, b1, w2, b2, w3, b3 = params
    in_dim, hid = w1.shape
    out_dim = w3.shape[1]
    assert in_dim <= LANE and hid <= LANE and out_dim <= LANE

    w_slab = jnp.zeros((3, LANE, LANE), jnp.float32)
    w_slab = w_slab.at[0, :in_dim, :hid].set(w1)
    w_slab = w_slab.at[1, :hid, :hid].set(w2)
    w_slab = w_slab.at[2, :hid, :out_dim].set(w3)

    bias = jnp.zeros((8, LANE), jnp.float32)
    bias = bias.at[0, :hid].set(b1.reshape(-1))
    bias = bias.at[1, :hid].set(b2.reshape(-1))
    bias = bias.at[2, :out_dim].set(b3.reshape(-1))

    return w_slab, bias, out_dim


def neural_network_forward(x, prepared):
    """Forward pass; `prepared` comes from prepare_params (no per-call padding)."""
    w_slab, bias, out_dim = prepared
    batch, in_dim = x.shape

    # Adaptive batch tile: amortize per-grid-step overhead (~0.35 us), but keep
    # >= 2 tiles for mid/large batches so v7x's two TensorCores both get work.
    if batch <= 128:
        tb = max(8, _round_up(batch, 8))
    else:
        tb = min(512, _round_up((batch + 1) // 2, 128))
    padded_batch = _round_up(batch, tb)
    if padded_batch != batch:
        x = jnp.pad(x, ((0, padded_batch - batch), (0, 0)))
    grid = (padded_batch // tb,)

    flops = 2 * batch * (in_dim * LANE + LANE * LANE + LANE * LANE)
    bytes_accessed = 4 * (padded_batch * in_dim + w_slab.size + bias.size
                          + padded_batch * out_dim)

    out = pl.pallas_call(
        mlp_kernel,
        out_shape=jax.ShapeDtypeStruct((padded_batch, out_dim), jnp.float32),
        grid_spec=pltpu.PrefetchScalarGridSpec(
            num_scalar_prefetch=0,
            grid=grid,
            in_specs=[
                # x tile: batch-tiled, full (small) feature dim -> pipelined DMA
                pl.BlockSpec((tb, in_dim), lambda i: (i, 0)),
                # fused weight slab, VMEM-resident across all tiles
                pl.BlockSpec((3, LANE, LANE), lambda i: (0, 0, 0)),
                # fused bias slab, VMEM-resident
                pl.BlockSpec((8, LANE), lambda i: (0, 0)),
            ],
            # true-width output block (last dim == full array dim -> legal)
            out_specs=pl.BlockSpec((tb, out_dim), lambda i: (i, 0)),
        ),
        compiler_params=pltpu.CompilerParams(
            dimension_semantics=("parallel",),   # shard tiles across TCs on v7x
            vmem_limit_bytes=32 * 1024 * 1024,   # documentation only; footprint << 2 MiB
        ),
        cost_estimate=pl.CostEstimate(
            flops=flops, transcendentals=0, bytes_accessed=bytes_accessed),
    )(x, w_slab, bias)

    return out[:batch]


def init_params(key, input_size=9, hidden_size=3, out_size=2):
    """Deterministic init mimicking PyTorch's uniform(-1/sqrt(fan_in), 1/sqrt(fan_in))."""
    ks = jax.random.split(key, 6)

    def linear(kw, kb, fan_in, fan_out):
        bound = 1.0 / jnp.sqrt(float(fan_in))
        w = jax.random.uniform(kw, (fan_in, fan_out), jnp.float32, -bound, bound)
        b = jax.random.uniform(kb, (1, fan_out), jnp.float32, -bound, bound)
        return w, b

    w1, b1 = linear(ks[0], ks[1], input_size, hidden_size)
    w2, b2 = linear(ks[2], ks[3], hidden_size, hidden_size)
    w3, b3 = linear(ks[4], ks[5], hidden_size, out_size)
    return (w1, b1, w2, b2, w3, b3)


if __name__ == "__main__":
    key = jax.random.PRNGKey(0)
    k_x, k_p = jax.random.split(key)

    # Small shapes consistent with the module; batch=200 exercises the adaptive
    # tiling (2 tiles of 128) plus the ragged-batch padding/slicing path.
    batch, input_size, hidden_size = 200, 9, 3
    x = jax.random.normal(k_x, (batch, input_size), dtype=jnp.float32)
    params = init_params(k_p, input_size=input_size, hidden_size=hidden_size)

    prepared = prepare_params(params)           # one-time padding / fusion
    out = jax.block_until_ready(neural_network_forward(x, prepared))

    # Reference check in plain JAX (same math).
    w1, b1, w2, b2, w3, b3 = params
    ref = jnp.maximum(x @ w1 + b1, 0.0)
    ref = jnp.maximum(ref @ w2 + b2, 0.0)
    ref = ref @ w3 + b3
    assert out.shape == (batch, 2)
    assert jnp.allclose(out, ref, atol=1e-5, rtol=1e-5)

    print("KERNEL_OK")
</pallas_src>

<mosaic_0001>
module attributes {stable_mosaic.version = 11 : i64} {
  func.func @mlp_kernel(%arg0: i32, %arg1: memref<128x9xf32, #tpu.memory_space<vmem>>, %arg2: memref<3x128x128xf32, #tpu.memory_space<vmem>>, %arg3: memref<8x128xf32, #tpu.memory_space<vmem>>, %arg4: memref<128x2xf32, #tpu.memory_space<vmem>>) attributes {dimension_semantics = [#tpu.dimension_semantics<parallel>], iteration_bounds = array<i64: 2>, scalar_prefetch = 0 : i64, scratch_operands = 0 : i64, tpu.core_type = #tpu.core_type<tc>, window_params = [{transform_indices = @transform_0, window_bounds = array<i64: 128, 9>}, {pipeline_mode = #tpu.pipeline_mode<synchronous>, transform_indices = @transform_1, window_bounds = array<i64: 3, 128, 128>}, {pipeline_mode = #tpu.pipeline_mode<synchronous>, transform_indices = @transform_2, window_bounds = array<i64: 8, 128>}, {transform_indices = @transform_3, window_bounds = array<i64: 128, 2>}]} {
    %c0 = arith.constant 0 : index
    %c0_0 = arith.constant 0 : index
    %0 = vector.load %arg3[%c0, %c0_0] : memref<8x128xf32, #tpu.memory_space<vmem>>, vector<8x128xf32>
    %1 = vector.extract_strided_slice %0 {offsets = [0, 0], sizes = [1, 128], strides = [1, 1]} : vector<8x128xf32> to vector<1x128xf32>
    %2 = vector.extract_strided_slice %0 {offsets = [1, 0], sizes = [1, 128], strides = [1, 1]} : vector<8x128xf32> to vector<1x128xf32>
    %3 = vector.extract_strided_slice %0 {offsets = [2, 0], sizes = [1, 2], strides = [1, 1]} : vector<8x128xf32> to vector<1x2xf32>
    %c0_1 = arith.constant 0 : index
    %c0_2 = arith.constant 0 : index
    %c0_3 = arith.constant 0 : index
    %4 = vector.load %arg2[%c0_1, %c0_2, %c0_3] : memref<3x128x128xf32, #tpu.memory_space<vmem>>, vector<1x128x128xf32>
    %5 = vector.shape_cast %4 : vector<1x128x128xf32> to vector<128x128xf32>
    %6 = vector.extract_strided_slice %5 {offsets = [0, 0], sizes = [9, 128], strides = [1, 1]} : vector<128x128xf32> to vector<9x128xf32>
    %c0_4 = arith.constant 0 : index
    %c0_5 = arith.constant 0 : index
    %7 = vector.load %arg1[%c0_4, %c0_5] : memref<128x9xf32, #tpu.memory_space<vmem>>, vector<128x9xf32>
    %cst = arith.constant dense<0.000000e+00> : vector<128x128xf32>
    %8 = tpu.matmul %7, %6, %cst {dimension_numbers = #tpu.dot_dimension_numbers<[1], [0], [0], [1], [0, 0, 1, 1], [], []>} : vector<128x9xf32>, vector<9x128xf32>, vector<128x128xf32> -> vector<128x128xf32>
    %9 = vector.broadcast %1 : vector<1x128xf32> to vector<128x128xf32>
    %10 = arith.addf %8, %9 : vector<128x128xf32>
    %cst_6 = arith.constant 0.000000e+00 : f32
    %11 = vector.broadcast %cst_6 : f32 to vector<128x128xf32>
    %12 = arith.maximumf %10, %11 : vector<128x128xf32>
    %c1 = arith.constant 1 : index
    %c0_7 = arith.constant 0 : index
    %c0_8 = arith.constant 0 : index
    %13 = vector.load %arg2[%c1, %c0_7, %c0_8] : memref<3x128x128xf32, #tpu.memory_space<vmem>>, vector<1x128x128xf32>
    %14 = vector.shape_cast %13 : vector<1x128x128xf32> to vector<128x128xf32>
    %cst_9 = arith.constant dense<0.000000e+00> : vector<128x128xf32>
    %15 = tpu.matmul %12, %14, %cst_9 {dimension_numbers = #tpu.dot_dimension_numbers<[1], [0], [0], [1], [0, 0, 1, 1], [], []>} : vector<128x128xf32>, vector<128x128xf32>, vector<128x128xf32> -> vector<128x128xf32>
    %16 = vector.broadcast %2 : vector<1x128xf32> to vector<128x128xf32>
    %17 = arith.addf %15, %16 : vector<128x128xf32>
    %cst_10 = arith.constant 0.000000e+00 : f32
    %18 = vector.broadcast %cst_10 : f32 to vector<128x128xf32>
    %19 = arith.maximumf %17, %18 : vector<128x128xf32>
    %c2 = arith.constant 2 : index
    %c0_11 = arith.constant 0 : index
    %c0_12 = arith.constant 0 : index
    %20 = vector.load %arg2[%c2, %c0_11, %c0_12] : memref<3x128x128xf32, #tpu.memory_space<vmem>>, vector<1x128x128xf32>
    %21 = vector.shape_cast %20 : vector<1x128x128xf32> to vector<128x128xf32>
    %cst_13 = arith.constant dense<0.000000e+00> : vector<128x128xf32>
    %22 = tpu.matmul %19, %21, %cst_13 {dimension_numbers = #tpu.dot_dimension_numbers<[1], [0], [0], [1], [0, 0, 1, 1], [], []>} : vector<128x128xf32>, vector<128x128xf32>, vector<128x128xf32> -> vector<128x128xf32>
    %23 = vector.extract_strided_slice %22 {offsets = [0, 0], sizes = [128, 2], strides = [1, 1]} : vector<128x128xf32> to vector<128x2xf32>
    %24 = vector.broadcast %3 : vector<1x2xf32> to vector<128x2xf32>
    %25 = arith.addf %23, %24 : vector<128x2xf32>
    %c0_14 = arith.constant 0 : index
    %c0_15 = arith.constant 0 : index
    %26 = vector.load %arg4[%c0_14, %c0_15] : memref<128x2xf32, #tpu.memory_space<vmem>>, vector<128x2xf32>
    tpu.vector_store %arg4[%c0_14, %c0_15], %25 {strides = array<i32>} : memref<128x2xf32, #tpu.memory_space<vmem>>, vector<128x2xf32>,
    return
  }
  func.func @transform_0(%arg0: i32) -> (i32, i32) {
    %c0_i32 = arith.constant 0 : i32
    %c0_i32_0 = arith.constant 0 : i32
    return %arg0, %c0_i32 : i32, i32
  }
  func.func @transform_1(%arg0: i32) -> (i32, i32, i32) {
    %c0_i32 = arith.constant 0 : i32
    %c0_i32_0 = arith.constant 0 : i32
    %c0_i32_1 = arith.constant 0 : i32
    %c0_i32_2 = arith.constant 0 : i32
    return %c0_i32, %c0_i32_0, %c0_i32_1 : i32, i32, i32
  }
  func.func @transform_2(%arg0: i32) -> (i32, i32) {
    %c0_i32 = arith.constant 0 : i32
    %c0_i32_0 = arith.constant 0 : i32
    %c0_i32_1 = arith.constant 0 : i32
    return %c0_i32, %c0_i32_0 : i32, i32
  }
  func.func @transform_3(%arg0: i32) -> (i32, i32) {
    %c0_i32 = arith.constant 0 : i32
    %c0_i32_0 = arith.constant 0 : i32
    return %arg0, %c0_i32 : i32, i32
  }
}

</mosaic_0001>

<llo_original>
// kernel: tpu_custom_call.1
$region0: #{tpu_custom_call.1}
  #allocation0 [shape = 'u32[]', space=smem, size = 0x4, offset = 0x4, fixed_abs, tag = 'smem constant byte address 0x4 - core index']
  #allocation1 [shape = 'u32[144,128]{1,0:T(1,128)}', space=vmem, size = 0x12000, scoped, tag = 'internal scratch']
  %s0 = inlined_call_operand.vmem [shape: f32[256,9], index: 0, kind: input, shape index: {}]
  %s1 = inlined_call_operand.hbm [shape: f32[3,128,128], index: 1, kind: input, shape index: {}]
  %s2 = inlined_call_operand.vmem [shape: f32[8,128], index: 2, kind: input, shape index: {}]
  %s3 = inlined_call_operand.vmem [shape: f32[256,2], index: 3, kind: output, shape index: {}]
  %s4 = sld [smem:[#allocation0]]
  $region49: #{tpu_custom_call.1} parent=0
    _
  %s6 = ssub.s32 1, %s4
  %s7 = scalar_select 0, %s6, %s4
  $region1: #{tpu_custom_call.1} parent=0
    #allocation2 [shape = 'u8[196608]{0}', space=vmem, size = 0x30000, scoped, tag = 'input window, operand 1, single buffered']
    #allocation3 [shape = 's32[2]{0}', space=sflag, size = 0x8, scoped, tag = 'scoped memory for tpu_custom_call.1']
    %8 = vsyncpa [#allocation3], 0
    loop: start=0, step=1, limit=4
    $region2: #{tpu_custom_call.1} parent=1 // loop_pre_header
      _
    $region3: #{tpu_custom_call.1} parent=1 // loop_header
      %s10 = sphi 0, %s14
      %p11 = scmp.ge.s32.totalorder %s10, 4
      %s20 = sphi 0, %s22
      %s23 = sphi 0, %s20
      %s24 = sphi 0, %s23
      %s40 = sphi 0, %s24
      %s44 = sphi 0, %s44
      %s46 = sphi 0, %s44
      %s47 = sphi 0, %s46
      %s61 = sphi 0, %s47
      %s65 = sphi 0, %s65
      %s67 = sphi 0, %s65
      %s68 = sphi 0, %s67
      %s82 = sphi 0, %s68
      %s88 = sphi 0, %s90
      %s91 = sphi 0, %s88
      %s92 = sphi 0, %s91
      %s108 = sphi 0, %s92
    $region4: #{tpu_custom_call.1} parent=1 // loop_header_branch
      %13 = sbr.rel (%p11) target = $region8
    $region5: #{tpu_custom_call.1} parent=1 // loop_body
      %s15 = ssub.s32 %s10, 1
      %s16 = ssub.s32 %s10, 2
      %s17 = sadd.s32 %s10, 1
      %s18 = ssub.s32 %s10, %s17
      %p19 = scmp.eq.s32.totalorder %s18, 0
      %s21 = sadd.s32 %s20, 1
      %s22 = scalar_select %p19, %s20, %s21
      %p25 = pneg %p19
      %p26 = scmp.eq.s32.totalorder %s10, 1
      %p27 = por %p25, %p26
      %p28 = scmp.ne.s32.totalorder %s20, %s23
      %p29 = scmp.eq.s32.totalorder %s10, 0
      %p30 = por %p28, %p29
      %p31 = scmp.ne.s32.totalorder %s20, %s23
      %p32 = scmp.eq.s32.totalorder %s15, 1
      %p33 = por %p31, %p32
      %p34 = scmp.ne.s32.totalorder %s23, %s24
      %p35 = scmp.eq.s32.totalorder %s15, 0
      %p36 = por %p34, %p35
      %p37 = scmp.ne.s32.totalorder %s23, %s24
      %p38 = scmp.eq.s32.totalorder %s16, 1
      %p39 = por %p37, %p38
      %p41 = scmp.ne.s32.totalorder %s24, %s40
      %p42 = scmp.eq.s32.totalorder %s16, 0
      %p43 = por %p41, %p42
      %s45 = sadd.s32 %s44, 1
      %p48 = scmp.eq.s32.totalorder %s10, 1
      %p49 = scmp.ne.s32.totalorder %s44, %s46
      %p50 = scmp.eq.s32.totalorder %s10, 0
      %p51 = por %p49, %p50
      %p52 = scmp.ne.s32.totalorder %s44, %s46
      %p53 = scmp.eq.s32.totalorder %s15, 1
      %p54 = por %p52, %p53
      %p55 = scmp.ne.s32.totalorder %s46, %s47
      %p56 = scmp.eq.s32.totalorder %s15, 0
      %p57 = por %p55, %p56
      %p58 = scmp.ne.s32.totalorder %s46, %s47
      %p59 = scmp.eq.s32.totalorder %s16, 1
      %p60 = por %p58, %p59
      %p62 = scmp.ne.s32.totalorder %s47, %s61
      %p63 = scmp.eq.s32.totalorder %s16, 0
      %p64 = por %p62, %p63
      %s66 = sadd.s32 %s65, 1
      %p69 = scmp.eq.s32.totalorder %s10, 1
      %p70 = scmp.ne.s32.totalorder %s65, %s67
      %p71 = scmp.eq.s32.totalorder %s10, 0
      %p72 = por %p70, %p71
      %p73 = scmp.ne.s32.totalorder %s65, %s67
      %p74 = scmp.eq.s32.totalorder %s15, 1
      %p75 = por %p73, %p74
      %p76 = scmp.ne.s32.totalorder %s67, %s68
      %p77 = scmp.eq.s32.totalorder %s15, 0
      %p78 = por %p76, %p77
      %p79 = scmp.ne.s32.totalorder %s67, %s68
      %p80 = scmp.eq.s32.totalorder %s16, 1
      %p81 = por %p79, %p80
      %p83 = scmp.ne.s32.totalorder %s68, %s82
      %p84 = scmp.eq.s32.totalorder %s16, 0
      %p85 = por %p83, %p84
      %s86 = ssub.s32 %s10, %s17
      %p87 = scmp.eq.s32.totalorder %s86, 0
      %s89 = sadd.s32 %s88, 1
      %s90 = scalar_select %p87, %s88, %s89
      %p93 = pneg %p87
      %p94 = scmp.eq.s32.totalorder %s10, 1
      %p95 = por %p93, %p94
      %p96 = scmp.ne.s32.totalorder %s88, %s91
      %p97 = scmp.eq.s32.totalorder %s10, 0
      %p98 = por %p96, %p97
      %p99 = scmp.ne.s32.totalorder %s88, %s91
      %p100 = scmp.eq.s32.totalorder %s15, 1
      %p101 = por %p99, %p100
      %p102 = scmp.ne.s32.totalorder %s91, %s92
      %p103 = scmp.eq.s32.totalorder %s15, 0
      %p104 = por %p102, %p103
      %p105 = scmp.ne.s32.totalorder %s91, %s92
      %p106 = scmp.eq.s32.totalorder %s16, 1
      %p107 = por %p105, %p106
      %p109 = scmp.ne.s32.totalorder %s92, %s108
      %p110 = scmp.eq.s32.totalorder %s16, 0
      %p111 = por %p109, %p110
      %p112 = scmp.le.s32.totalorder 1, %s10
      %p113 = scmp.lt.s32.totalorder %s10, 3
      %p114 = pnand %p112, %p113
      %p115 = pneg %p114
      // Predicated region
      $region9: #{tpu_custom_call.1} parent=5 // pred_check
        _
      $region10: #{tpu_custom_call.1} parent=5 // pred_check_branch
        %117 = sbr.rel (%p114) target = $region12
      $region11: #{tpu_custom_call.1} parent=5 // pred_region
        %s118 = ssub.s32 %s10, 1
        // Predicated region
        $region13: #{tpu_custom_call.1} parent=11 // pred_check
          %p119 = pneg %p57
        $region14: #{tpu_custom_call.1} parent=11 // pred_check_branch
          %121 = sbr.rel (%p119) target = $region16
        $region15: #{tpu_custom_call.1} parent=11 // pred_region
          %s123 = ssub.s32 6144, 6144
          %124 = vsyncadd [#allocation3], %s123
          %s125 = sshll.u32 [#allocation2], 4
          %s126 = int_to_ptr.vmem [resolvable:$true] %s125
          %131 = dma.hbm_to_vmem [thread:$0]  %s1, 6144, %s126, [#allocation3], 128, 128, 8
        $region16: #{tpu_custom_call.1} parent=11 // pred_fallthru
          _
        // Predicated region
        $region17: #{tpu_custom_call.1} parent=11 // pred_check
          %p132 = pneg %p78
        $region18: #{tpu_custom_call.1} parent=11 // pred_check_branch
          %134 = sbr.rel (%p132) target = $region20
        $region19: #{tpu_custom_call.1} parent=11 // pred_region
          _
        $region20: #{tpu_custom_call.1} parent=11 // pred_fallthru
          _
      $region12: #{tpu_custom_call.1} parent=5 // pred_fallthru
        _
      %p135 = scmp.lt.s32.totalorder %s10, 2
      // Predicated region
      $region21: #{tpu_custom_call.1} parent=5 // pred_check
        %p136 = pneg %p135
      $region22: #{tpu_custom_call.1} parent=5 // pred_check_branch
        %138 = sbr.rel (%p136) target = $region24
      $region23: #{tpu_custom_call.1} parent=5 // pred_region
        // Predicated region
        $region25: #{tpu_custom_call.1} parent=23 // pred_check
          %p139 = pneg %p30
        $region26: #{tpu_custom_call.1} parent=23 // pred_check_branch
          %141 = sbr.rel (%p139) target = $region28
        $region27: #{tpu_custom_call.1} parent=23 // pred_region
          %s142 = smul.u32 16, %s10
          %p143 = scmp.lt.s32.totalorder %s142, 31
          %s144 = scalar_select %p143, %s142, 31
          %s145 = smul.addr %s144, 8
          %s146 = scalar_lea.vmem %s0, %s145
          %s147 = smul.u32 16, %s10
        $region28: #{tpu_custom_call.1} parent=23 // pred_fallthru
          _
      $region24: #{tpu_custom_call.1} parent=5 // pred_fallthru
        _
      %p148 = scmp.le.s32.totalorder 1, %s10
      %p149 = scmp.lt.s32.totalorder %s10, 3
      %p150 = pnand %p148, %p149
      %p151 = pneg %p150
      // Predicated region
      $region29: #{tpu_custom_call.1} parent=5 // pred_check
        _
      $region30: #{tpu_custom_call.1} parent=5 // pred_check_branch
        %153 = sbr.rel (%p150) target = $region32
      $region31: #{tpu_custom_call.1} parent=5 // pred_region
        %s154 = ssub.s32 %s10, 1
        // Predicated region
        $region33: #{tpu_custom_call.1} parent=31 // pred_check
          %p155 = pneg %p57
        $region34: #{tpu_custom_call.1} parent=31 // pred_check_branch
          %157 = sbr.rel (%p155) target = $region36
        $region35: #{tpu_custom_call.1} parent=31 // pred_region
          %158 = dma.done [#allocation3], 6144
        $region36: #{tpu_custom_call.1} parent=31 // pred_fallthru
          _
        %s159 = smul.u32 16, %s15
        %p160 = scmp.lt.s32.totalorder %s159, 31
        %s161 = scalar_select %p160, %s159, 31
        %s162 = smul.addr %s161, 8
        %s163 = scalar_lea.vmem %s0, %s162
        %p164 = pneg %p36
        %p165 = pneg %p33
        %p166 = pneg %p57
        %p167 = pneg %p54
        %p168 = pneg %p78
        %p169 = pneg %p75
        %p170 = pneg %p104
        %p171 = pneg %p101
        %s172 = smul.u32 16, %s15
        %p173 = scmp.lt.s32.totalorder %s172, 31
        %s174 = scalar_select %p173, %s172, 31
        %s175 = smul.addr %s174, 8
        %s176 = scalar_lea.vmem %s3, %s175
        %s177 = smul.u32 16, %s15
        %p178 = scmp.lt.s32.totalorder %s177, 31
        %s179 = scalar_select %p178, %s177, 31
        %s180 = smul.addr %s179, 8
        %s181 = scalar_lea.vmem %s0, %s180
        %s182 = smul.u32 16, %s15
        %s183 = smul.u32 16, %s15
        %p184 = scmp.lt.s32.totalorder %s183, 31
        %s185 = scalar_select %p184, %s183, 31
        %s186 = smul.addr %s185, 8
        %s187 = scalar_lea.vmem %s3, %s186
        %s188 = smul.u32 16, %s15
        %v189 = vld [vmem:[%s2] sm:$0xff]
        %v190 = vld [vmem:[#allocation2] sm:$0xff]
        %v191 = vld [vmem:[#allocation2 + $0x8] sm:$0xff]
        %v192 = vld [vmem:[%s181] sm:$0xff]
        %v193 = vld [vmem:[%s181 + $0x8] sm:$0xff]
        %v194 = vld [vmem:[%s181 + $0x10] sm:$0xff]
        %v195 = vld [vmem:[%s181 + $0x18] sm:$0xff]
        %v196 = vld [vmem:[%s181 + $0x20] sm:$0xff]
        %v197 = vld [vmem:[%s181 + $0x28] sm:$0xff]
        %v198 = vld [vmem:[%s181 + $0x30] sm:$0xff]
        %v199 = vld [vmem:[%s181 + $0x38] sm:$0xff]
        %v200 = vld [vmem:[%s181 + $0x40] sm:$0xff]
        %v201 = vld [vmem:[%s181 + $0x48] sm:$0xff]
        %v202 = vld [vmem:[%s181 + $0x50] sm:$0xff]
        %v203 = vld [vmem:[%s181 + $0x58] sm:$0xff]
        %v204 = vld [vmem:[%s181 + $0x60] sm:$0xff]
        %v205 = vld [vmem:[%s181 + $0x68] sm:$0xff]
        %v206 = vld [vmem:[%s181 + $0x70] sm:$0xff]
        %v207 = vld [vmem:[%s181 + $0x78] sm:$0xff]
        %v208 = vlaneseq
        %v209 = vshrl.u32 %v208, 7
        %v210 = vsub.s32 0, %v209
        %v211 = vrot.slane %v189, %v210
        %vm212 = vcmask 72704
        %v214 = vsel %vm212, %v192, 0
        %v217 = vsel %vm212, %v193, 0
        %v220 = vsel %vm212, %v194, 0
        %v223 = vsel %vm212, %v195, 0
        %v226 = vsel %vm212, %v196, 0
        %v229 = vsel %vm212, %v197, 0
        %v232 = vsel %vm212, %v198, 0
        %v235 = vsel %vm212, %v199, 0
        %v238 = vsel %vm212, %v200, 0
        %v241 = vsel %vm212, %v201, 0
        %v244 = vsel %vm212, %v202, 0
        %v247 = vsel %vm212, %v203, 0
        %v250 = vsel %vm212, %v204, 0
        %v253 = vsel %vm212, %v205, 0
        %v256 = vsel %vm212, %v206, 0
        %v259 = vsel %vm212, %v207, 0
        %vm261 = vcmask 1040384
        %v263 = vsel %vm261, %v191, 0
        %265 = vmatprep.subr.mxu0 0.0
        %266 = vmatpush1.msra.mxu0 %v190
        %267 = vmatprep.subr.mxu0 0.0
        %268 = vmatpush1.msra.mxu0 %v263
        %269 = vmatprep.subr.mxu0 0.0
        %270 = vmatpush1.msra.mxu0 0.0
        %271 = vmatprep.subr.mxu0 0.0
        %272 = vmatpush1.msra.mxu0 0.0
        %273 = vmatprep.subr.mxu0 0.0
        %274 = vmatpush1.msra.mxu0 0.0
        %275 = vmatprep.subr.mxu0 0.0
        %276 = vmatpush1.msra.mxu0 0.0
        %277 = vmatprep.subr.mxu0 0.0
        %278 = vmatpush1.msra.mxu0 0.0
        %279 = vmatprep.subr.mxu0 0.0
        %280 = vmatpush1.msra.mxu0 0.0
        %281 = vmatprep.subr.mxu0 0.0
        %282 = vmatpush1.msra.mxu0 0.0
        %283 = vmatprep.subr.mxu0 0.0
        %284 = vmatpush1.msra.mxu0 0.0
        %285 = vmatprep.subr.mxu0 0.0
        %286 = vmatpush1.msra.mxu0 0.0
        %287 = vmatprep.subr.mxu0 0.0
        %288 = vmatpush1.msra.mxu0 0.0
        %289 = vmatprep.subr.mxu0 0.0
        %290 = vmatpush1.msra.mxu0 0.0
        %291 = vmatprep.subr.mxu0 0.0
        %292 = vmatpush1.msra.mxu0 0.0
        %293 = vmatprep.subr.mxu0 0.0
        %294 = vmatpush1.msra.mxu0 0.0
        %295 = vmatprep.subr.mxu0 0.0
        %296 = vmatpush1.msra.mxu0 0.0
        %297 = vmatprep.subr.mxu0 0.0
        %298 = vmatpush1.msra.mxu0 0.0
        %299 = vmatprep.subr.mxu0 0.0
        %300 = vmatpush1.msra.mxu0 0.0
        %301 = vmatprep.subr.mxu0 0.0
        %302 = vmatpush1.msra.mxu0 0.0
        %303 = vmatprep.subr.mxu0 0.0
        %304 = vmatpush1.msra.mxu0 0.0
        %305 = vmatprep.subr.mxu0 0.0
        %306 = vmatpush1.msra.mxu0 0.0
        %307 = vmatprep.subr.mxu0 0.0
        %308 = vmatpush1.msra.mxu0 0.0
        %309 = vmatprep.subr.mxu0 0.0
        %310 = vmatpush1.msra.mxu0 0.0
        %311 = vmatprep.subr.mxu0 0.0
        %312 = vmatpush1.msra.mxu0 0.0
        %313 = vmatprep.subr.mxu0 0.0
        %314 = vmatpush1.msra.mxu0 0.0
        %315 = vmatprep.subr.mxu0 0.0
        %316 = vmatpush1.msra.mxu0 0.0
        %317 = vmatprep.subr.mxu0 0.0
        %318 = vmatpush1.msra.mxu0 0.0
        %319 = vmatprep.subr.mxu0 0.0
        %320 = vmatpush1.msra.mxu0 0.0
        %321 = vmatprep.subr.mxu0 0.0
        %322 = vmatpush1.msra.mxu0 0.0
        %323 = vmatprep.subr.mxu0 0.0
        %324 = vmatpush1.msra.mxu0 0.0
        %325 = vmatprep.subr.mxu0 0.0
        %326 = vmatpush1.msra.mxu0 0.0
        %327 = vmatprep.subr.mxu0 0.0
        %328 = vmatpush1.msra.mxu0 0.0
        %329 = vmatprep.mubr.f32.mxu0 0.0
        %330 = vmatmul.mubr.f32.gmra.mrb[0].mxu0 %v214
        %v331 = vpop.f32.mrb[0].mxu0
        %v332 = vadd.f32 %v211, %v331
        %v333 = vpop.f32.mrb[0].mxu0
        %334 = vmatprep.mubr.f32.mxu0 0.0
        %335 = vmatmul.mubr.f32.gmra.mrb[0].mxu0 %v217
        %v336 = vpop.f32.mrb[0].mxu0
        %v337 = vadd.f32 %v211, %v336
        %v338 = vpop.f32.mrb[0].mxu0
        %339 = vmatprep.mubr.f32.mxu0 0.0
        %340 = vmatmul.mubr.f32.gmra.mrb[0].mxu0 %v220
        %v341 = vpop.f32.mrb[0].mxu0
        %v342 = vadd.f32 %v211, %v341
        %v343 = vpop.f32.mrb[0].mxu0
        %344 = vmatprep.mubr.f32.mxu0 0.0
        %345 = vmatmul.mubr.f32.gmra.mrb[0].mxu0 %v223
        %v346 = vpop.f32.mrb[0].mxu0
        %v347 = vadd.f32 %v211, %v346
        %v348 = vpop.f32.mrb[0].mxu0
        %349 = vmatprep.mubr.f32.mxu0 0.0
        %350 = vmatmul.mubr.f32.gmra.mrb[0].mxu0 %v226
        %v351 = vpop.f32.mrb[0].mxu0
        %v352 = vadd.f32 %v211, %v351
        %v353 = vpop.f32.mrb[0].mxu0
        %354 = vmatprep.mubr.f32.mxu0 0.0
        %355 = vmatmul.mubr.f32.gmra.mrb[0].mxu0 %v229
        %v356 = vpop.f32.mrb[0].mxu0
        %v357 = vadd.f32 %v211, %v356
        %v358 = vpop.f32.mrb[0].mxu0
        %359 = vmatprep.mubr.f32.mxu0 0.0
        %360 = vmatmul.mubr.f32.gmra.mrb[0].mxu0 %v232
        %v361 = vpop.f32.mrb[0].mxu0
        %v362 = vadd.f32 %v211, %v361
        %v363 = vpop.f32.mrb[0].mxu0
        %364 = vmatprep.mubr.f32.mxu0 0.0
        %365 = vmatmul.mubr.f32.gmra.mrb[0].mxu0 %v235
        %v366 = vpop.f32.mrb[0].mxu0
        %v367 = vadd.f32 %v211, %v366
        %v368 = vpop.f32.mrb[0].mxu0
        %369 = vmatprep.mubr.f32.mxu0 0.0
        %370 = vmatmul.mubr.f32.gmra.mrb[0].mxu0 %v238
        %v371 = vpop.f32.mrb[0].mxu0
        %v372 = vadd.f32 %v211, %v371
        %v373 = vpop.f32.mrb[0].mxu0
        %374 = vmatprep.mubr.f32.mxu0 0.0
        %375 = vmatmul.mubr.f32.gmra.mrb[0].mxu0 %v241
        %v376 = vpop.f32.mrb[0].mxu0
        %v377 = vadd.f32 %v211, %v376
        %v378 = vpop.f32.mrb[0].mxu0
        %379 = vmatprep.mubr.f32.mxu0 0.0
        %380 = vmatmul.mubr.f32.gmra.mrb[0].mxu0 %v244
        %v381 = vpop.f32.mrb[0].mxu0
        %v382 = vadd.f32 %v211, %v381
        %v383 = vpop.f32.mrb[0].mxu0
        %384 = vmatprep.mubr.f32.mxu0 0.0
        %385 = vmatmul.mubr.f32.gmra.mrb[0].mxu0 %v247
        %v386 = vpop.f32.mrb[0].mxu0
        %v387 = vadd.f32 %v211, %v386
        %v388 = vpop.f32.mrb[0].mxu0
        %389 = vmatprep.mubr.f32.mxu0 0.0
        %390 = vmatmul.mubr.f32.gmra.mrb[0].mxu0 %v250
        %v391 = vpop.f32.mrb[0].mxu0
        %v392 = vadd.f32 %v211, %v391
        %v393 = vpop.f32.mrb[0].mxu0
        %394 = vmatprep.mubr.f32.mxu0 0.0
        %395 = vmatmul.mubr.f32.gmra.mrb[0].mxu0 %v253
        %v396 = vpop.f32.mrb[0].mxu0
        %v397 = vadd.f32 %v211, %v396
        %v398 = vpop.f32.mrb[0].mxu0
        %399 = vmatprep.mubr.f32.mxu0 0.0
        %400 = vmatmul.mubr.f32.gmra.mrb[0].mxu0 %v256
        %v401 = vpop.f32.mrb[0].mxu0
        %v402 = vadd.f32 %v211, %v401
        %v403 = vpop.f32.mrb[0].mxu0
        %404 = vmatprep.mubr.f32.mxu0 0.0
        %405 = vmatmul.mubr.f32.gmra.mrb[0].mxu0 %v259
        %v406 = vpop.f32.mrb[0].mxu0
        %v407 = vadd.f32 %v211, %v406
        %v408 = vpop.f32.mrb[0].mxu0
        %409 = vdwg.mxu0
        %v410 = vmax.f32 %v332, 0.0
        %v411 = vmax.f32 %v337, 0.0
        %v412 = vmax.f32 %v342, 0.0
        %v413 = vmax.f32 %v347, 0.0
        %v414 = vmax.f32 %v352, 0.0
        %v415 = vmax.f32 %v357, 0.0
        %v416 = vmax.f32 %v362, 0.0
        %v417 = vmax.f32 %v367, 0.0
        %v418 = vmax.f32 %v372, 0.0
        %v419 = vmax.f32 %v377, 0.0
        %v420 = vmax.f32 %v382, 0.0
        %v421 = vmax.f32 %v387, 0.0
        %v422 = vmax.f32 %v392, 0.0
        %v423 = vmax.f32 %v397, 0.0
        %v424 = vmax.f32 %v402, 0.0
        %v425 = vmax.f32 %v407, 0.0
        %s426 = scalar_lea.vmem [#allocation2], 128
        %v427 = vld [vmem:[%s426] sm:$0xff]
        %v428 = vld [vmem:[%s426 + $0x8] sm:$0xff]
        %v429 = vld [vmem:[%s426 + $0x10] sm:$0xff]
        %v430 = vld [vmem:[%s426 + $0x18] sm:$0xff]
        %v431 = vld [vmem:[%s426 + $0x20] sm:$0xff]
        %v432 = vld [vmem:[%s426 + $0x28] sm:$0xff]
        %v433 = vld [vmem:[%s426 + $0x30] sm:$0xff]
        %v434 = vld [vmem:[%s426 + $0x38] sm:$0xff]
        %v435 = vld [vmem:[%s426 + $0x40] sm:$0xff]
        %v436 = vld [vmem:[%s426 + $0x48] sm:$0xff]
        %v437 = vld [vmem:[%s426 + $0x50] sm:$0xff]
        %v438 = vld [vmem:[%s426 + $0x58] sm:$0xff]
        %v439 = vld [vmem:[%s426 + $0x60] sm:$0xff]
        %v440 = vld [vmem:[%s426 + $0x68] sm:$0xff]
        %v441 = vld [vmem:[%s426 + $0x70] sm:$0xff]
        %v442 = vld [vmem:[%s426 + $0x78] sm:$0xff]
        %v443 = vlaneseq
        %v444 = vshrl.u32 %v443, 7
        %v445 = vsub.s32 1, %v444
        %v446 = vrot.slane %v189, %v445
        %447 = vmatprep.subr.mxu0 0.0
        %448 = vmatpush1.msra.mxu0 %v427
        %449 = vmatprep.subr.mxu0 0.0
        %450 = vmatpush1.msra.mxu0 %v428
        %451 = vmatprep.subr.mxu0 0.0
        %452 = vmatpush1.msra.mxu0 %v429
        %453 = vmatprep.subr.mxu0 0.0
        %454 = vmatpush1.msra.mxu0 %v430
        %455 = vmatprep.subr.mxu0 0.0
        %456 = vmatpush1.msra.mxu0 %v431
        %457 = vmatprep.subr.mxu0 0.0
        %458 = vmatpush1.msra.mxu0 %v432
        %459 = vmatprep.subr.mxu0 0.0
        %460 = vmatpush1.msra.mxu0 %v433
        %461 = vmatprep.subr.mxu0 0.0
        %462 = vmatpush1.msra.mxu0 %v434
        %463 = vmatprep.subr.mxu0 0.0
        %464 = vmatpush1.msra.mxu0 %v435
        %465 = vmatprep.subr.mxu0 0.0
        %466 = vmatpush1.msra.mxu0 %v436
        %467 = vmatprep.subr.mxu0 0.0
        %468 = vmatpush1.msra.mxu0 %v437
        %469 = vmatprep.subr.mxu0 0.0
        %470 = vmatpush1.msra.mxu0 %v438
        %471 = vmatprep.subr.mxu0 0.0
        %472 = vmatpush1.msra.mxu0 %v439
        %473 = vmatprep.subr.mxu0 0.0
        %474 = vmatpush1.msra.mxu0 %v440
        %475 = vmatprep.subr.mxu0 0.0
        %476 = vmatpush1.msra.mxu0 %v441
        %477 = vmatprep.subr.mxu0 0.0
        %478 = vmatpush1.msra.mxu0 %v442
        %479 = vmatprep.subr.mxu0 0.0
        %480 = vmatpush1.msra.mxu0 0.0
        %481 = vmatprep.subr.mxu0 0.0
        %482 = vmatpush1.msra.mxu0 0.0
        %483 = vmatprep.subr.mxu0 0.0
        %484 = vmatpush1.msra.mxu0 0.0
        %485 = vmatprep.subr.mxu0 0.0
        %486 = vmatpush1.msra.mxu0 0.0
        %487 = vmatprep.subr.mxu0 0.0
        %488 = vmatpush1.msra.mxu0 0.0
        %489 = vmatprep.subr.mxu0 0.0
        %490 = vmatpush1.msra.mxu0 0.0
        %491 = vmatprep.subr.mxu0 0.0
        %492 = vmatpush1.msra.mxu0 0.0
        %493 = vmatprep.subr.mxu0 0.0
        %494 = vmatpush1.msra.mxu0 0.0
        %495 = vmatprep.subr.mxu0 0.0
        %496 = vmatpush1.msra.mxu0 0.0
        %497 = vmatprep.subr.mxu0 0.0
        %498 = vmatpush1.msra.mxu0 0.0
        %499 = vmatprep.subr.mxu0 0.0
        %500 = vmatpush1.msra.mxu0 0.0
        %501 = vmatprep.subr.mxu0 0.0
        %502 = vmatpush1.msra.mxu0 0.0
        %503 = vmatprep.subr.mxu0 0.0
        %504 = vmatpush1.msra.mxu0 0.0
        %505 = vmatprep.subr.mxu0 0.0
        %506 = vmatpush1.msra.mxu0 0.0
        %507 = vmatprep.subr.mxu0 0.0
        %508 = vmatpush1.msra.mxu0 0.0
        %509 = vmatprep.subr.mxu0 0.0
        %510 = vmatpush1.msra.mxu0 0.0
        %511 = vmatprep.mubr.f32.mxu0 0.0
        %512 = vmatmul.mubr.f32.gmra.mrb[0].mxu0 %v410
        %v513 = vpop.f32.mrb[0].mxu0
        %v514 = vadd.f32 %v446, %v513
        %v515 = vpop.f32.mrb[0].mxu0
        %516 = vmatprep.mubr.f32.mxu0 0.0
        %517 = vmatmul.mubr.f32.gmra.mrb[0].mxu0 %v411
        %v518 = vpop.f32.mrb[0].mxu0
        %v519 = vadd.f32 %v446, %v518
        %v520 = vpop.f32.mrb[0].mxu0
        %521 = vmatprep.mubr.f32.mxu0 0.0
        %522 = vmatmul.mubr.f32.gmra.mrb[0].mxu0 %v412
        %v523 = vpop.f32.mrb[0].mxu0
        %v524 = vadd.f32 %v446, %v523
        %v525 = vpop.f32.mrb[0].mxu0
        %526 = vmatprep.mubr.f32.mxu0 0.0
        %527 = vmatmul.mubr.f32.gmra.mrb[0].mxu0 %v413
        %v528 = vpop.f32.mrb[0].mxu0
        %v529 = vadd.f32 %v446, %v528
        %v530 = vpop.f32.mrb[0].mxu0
        %531 = vmatprep.mubr.f32.mxu0 0.0
        %532 = vmatmul.mubr.f32.gmra.mrb[0].mxu0 %v414
        %v533 = vpop.f32.mrb[0].mxu0
        %v534 = vadd.f32 %v446, %v533
        %v535 = vpop.f32.mrb[0].mxu0
        %536 = vmatprep.mubr.f32.mxu0 0.0
        %537 = vmatmul.mubr.f32.gmra.mrb[0].mxu0 %v415
        %v538 = vpop.f32.mrb[0].mxu0
        %v539 = vadd.f32 %v446, %v538
        %v540 = vpop.f32.mrb[0].mxu0
        %541 = vmatprep.mubr.f32.mxu0 0.0
        %542 = vmatmul.mubr.f32.gmra.mrb[0].mxu0 %v416
        %v543 = vpop.f32.mrb[0].mxu0
        %v544 = vadd.f32 %v446, %v543
        %v545 = vpop.f32.mrb[0].mxu0
        %546 = vmatprep.mubr.f32.mxu0 0.0
        %547 = vmatmul.mubr.f32.gmra.mrb[0].mxu0 %v417
        %v548 = vpop.f32.mrb[0].mxu0
        %v549 = vadd.f32 %v446, %v548
        %v550 = vpop.f32.mrb[0].mxu0
        %551 = vmatprep.mubr.f32.mxu0 0.0
        %552 = vmatmul.mubr.f32.gmra.mrb[0].mxu0 %v418
        %v553 = vpop.f32.mrb[0].mxu0
        %v554 = vadd.f32 %v446, %v553
        %v555 = vpop.f32.mrb[0].mxu0
        %556 = vmatprep.mubr.f32.mxu0 0.0
        %557 = vmatmul.mubr.f32.gmra.mrb[0].mxu0 %v419
        %v558 = vpop.f32.mrb[0].mxu0
        %v559 = vadd.f32 %v446, %v558
        %v560 = vpop.f32.mrb[0].mxu0
        %561 = vmatprep.mubr.f32.mxu0 0.0
        %562 = vmatmul.mubr.f32.gmra.mrb[0].mxu0 %v420
        %v563 = vpop.f32.mrb[0].mxu0
        %v564 = vadd.f32 %v446, %v563
        %v565 = vpop.f32.mrb[0].mxu0
        %566 = vmatprep.mubr.f32.mxu0 0.0
        %567 = vmatmul.mubr.f32.gmra.mrb[0].mxu0 %v421
        %v568 = vpop.f32.mrb[0].mxu0
        %v569 = vadd.f32 %v446, %v568
        %v570 = vpop.f32.mrb[0].mxu0
        %571 = vmatprep.mubr.f32.mxu0 0.0
        %572 = vmatmul.mubr.f32.gmra.mrb[0].mxu0 %v422
        %v573 = vpop.f32.mrb[0].mxu0
        %v574 = vadd.f32 %v446, %v573
        %v575 = vpop.f32.mrb[0].mxu0
        %576 = vmatprep.mubr.f32.mxu0 0.0
        %577 = vmatmul.mubr.f32.gmra.mrb[0].mxu0 %v423
        %v578 = vpop.f32.mrb[0].mxu0
        %v579 = vadd.f32 %v446, %v578
        %v580 = vpop.f32.mrb[0].mxu0
        %581 = vmatprep.mubr.f32.mxu0 0.0
        %582 = vmatmul.mubr.f32.gmra.mrb[0].mxu0 %v424
        %v583 = vpop.f32.mrb[0].mxu0
        %v584 = vadd.f32 %v446, %v583
        %v585 = vpop.f32.mrb[0].mxu0
        %586 = vmatprep.mubr.f32.mxu0 0.0
        %587 = vmatmul.mubr.f32.gmra.mrb[0].mxu0 %v425
        %v588 = vpop.f32.mrb[0].mxu0
        %v589 = vadd.f32 %v446, %v588
        %v590 = vpop.f32.mrb[0].mxu0
        %591 = vdwg.mxu0
        %v592 = vmax.f32 %v514, 0.0
        %v593 = vmax.f32 %v519, 0.0
        %v594 = vmax.f32 %v524, 0.0
        %v595 = vmax.f32 %v529, 0.0
        %v596 = vmax.f32 %v534, 0.0
        %v597 = vmax.f32 %v539, 0.0
        %v598 = vmax.f32 %v544, 0.0
        %v599 = vmax.f32 %v549, 0.0
        %v600 = vmax.f32 %v554, 0.0
        %v601 = vmax.f32 %v559, 0.0
        %v602 = vmax.f32 %v564, 0.0
        %v603 = vmax.f32 %v569, 0.0
        %v604 = vmax.f32 %v574, 0.0
        %v605 = vmax.f32 %v579, 0.0
        %v606 = vmax.f32 %v584, 0.0
        %v607 = vmax.f32 %v589, 0.0
        %s608 = scalar_lea.vmem [#allocation2], 256
        %v609 = vld [vmem:[%s608] sm:$0xff]
        %v610 = vld [vmem:[%s608 + $0x8] sm:$0xff]
        %v611 = vld [vmem:[%s608 + $0x10] sm:$0xff]
        %v612 = vld [vmem:[%s608 + $0x18] sm:$0xff]
        %v613 = vld [vmem:[%s608 + $0x20] sm:$0xff]
        %v614 = vld [vmem:[%s608 + $0x28] sm:$0xff]
        %v615 = vld [vmem:[%s608 + $0x30] sm:$0xff]
        %v616 = vld [vmem:[%s608 + $0x38] sm:$0xff]
        %v617 = vld [vmem:[%s608 + $0x40] sm:$0xff]
        %v618 = vld [vmem:[%s608 + $0x48] sm:$0xff]
        %v619 = vld [vmem:[%s608 + $0x50] sm:$0xff]
        %v620 = vld [vmem:[%s608 + $0x58] sm:$0xff]
        %v621 = vld [vmem:[%s608 + $0x60] sm:$0xff]
        %v622 = vld [vmem:[%s608 + $0x68] sm:$0xff]
        %v623 = vld [vmem:[%s608 + $0x70] sm:$0xff]
        %v624 = vld [vmem:[%s608 + $0x78] sm:$0xff]
        %625 = vmatprep.subr.mxu0 0.0
        %626 = vmatpush1.msra.mxu0 %v609
        %627 = vmatprep.subr.mxu0 0.0
        %628 = vmatpush1.msra.mxu0 %v610
        %629 = vmatprep.subr.mxu0 0.0
        %630 = vmatpush1.msra.mxu0 %v611
        %631 = vmatprep.subr.mxu0 0.0
        %632 = vmatpush1.msra.mxu0 %v612
        %633 = vmatprep.subr.mxu0 0.0
        %634 = vmatpush1.msra.mxu0 %v613
        %635 = vmatprep.subr.mxu0 0.0
        %636 = vmatpush1.msra.mxu0 %v614
        %637 = vmatprep.subr.mxu0 0.0
        %638 = vmatpush1.msra.mxu0 %v615
        %639 = vmatprep.subr.mxu0 0.0
        %640 = vmatpush1.msra.mxu0 %v616
        %641 = vmatprep.subr.mxu0 0.0
        %642 = vmatpush1.msra.mxu0 %v617
        %643 = vmatprep.subr.mxu0 0.0
        %644 = vmatpush1.msra.mxu0 %v618
        %645 = vmatprep.subr.mxu0 0.0
        %646 = vmatpush1.msra.mxu0 %v619
        %647 = vmatprep.subr.mxu0 0.0
        %648 = vmatpush1.msra.mxu0 %v620
        %649 = vmatprep.subr.mxu0 0.0
        %650 = vmatpush1.msra.mxu0 %v621
        %651 = vmatprep.subr.mxu0 0.0
        %652 = vmatpush1.msra.mxu0 %v622
        %653 = vmatprep.subr.mxu0 0.0
        %654 = vmatpush1.msra.mxu0 %v623
        %655 = vmatprep.subr.mxu0 0.0
        %656 = vmatpush1.msra.mxu0 %v624
        %657 = vmatprep.subr.mxu0 0.0
        %658 = vmatpush1.msra.mxu0 0.0
        %659 = vmatprep.subr.mxu0 0.0
        %660 = vmatpush1.msra.mxu0 0.0
        %661 = vmatprep.subr.mxu0 0.0
        %662 = vmatpush1.msra.mxu0 0.0
        %663 = vmatprep.subr.mxu0 0.0
        %664 = vmatpush1.msra.mxu0 0.0
        %665 = vmatprep.subr.mxu0 0.0
        %666 = vmatpush1.msra.mxu0 0.0
        %667 = vmatprep.subr.mxu0 0.0
        %668 = vmatpush1.msra.mxu0 0.0
        %669 = vmatprep.subr.mxu0 0.0
        %670 = vmatpush1.msra.mxu0 0.0
        %671 = vmatprep.subr.mxu0 0.0
        %672 = vmatpush1.msra.mxu0 0.0
        %673 = vmatprep.subr.mxu0 0.0
        %674 = vmatpush1.msra.mxu0 0.0
        %675 = vmatprep.subr.mxu0 0.0
        %676 = vmatpush1.msra.mxu0 0.0
        %677 = vmatprep.subr.mxu0 0.0
        %678 = vmatpush1.msra.mxu0 0.0
        %679 = vmatprep.subr.mxu0 0.0
        %680 = vmatpush1.msra.mxu0 0.0
        %681 = vmatprep.subr.mxu0 0.0
        %682 = vmatpush1.msra.mxu0 0.0
        %683 = vmatprep.subr.mxu0 0.0
        %684 = vmatpush1.msra.mxu0 0.0
        %685 = vmatprep.subr.mxu0 0.0
        %686 = vmatpush1.msra.mxu0 0.0
        %687 = vmatprep.subr.mxu0 0.0
        %688 = vmatpush1.msra.mxu0 0.0
        %689 = vmatprep.mubr.f32.mxu0 0.0
        %690 = vmatmul.mubr.f32.gmra.mrb[0].mxu0 %v592
        %v691 = vpop.f32.mrb[0].mxu0
        %v692 = vadd.f32 0.0, %v691
        %v693 = vpop.f32.mrb[0].mxu0
        %694 = vmatprep.mubr.f32.mxu0 0.0
        %695 = vmatmul.mubr.f32.gmra.mrb[0].mxu0 %v593
        %v696 = vpop.f32.mrb[0].mxu0
        %v697 = vadd.f32 0.0, %v696
        %v698 = vpop.f32.mrb[0].mxu0
        %699 = vmatprep.mubr.f32.mxu0 0.0
        %700 = vmatmul.mubr.f32.gmra.mrb[0].mxu0 %v594
        %v701 = vpop.f32.mrb[0].mxu0
        %v702 = vadd.f32 0.0, %v701
        %v703 = vpop.f32.mrb[0].mxu0
        %704 = vmatprep.mubr.f32.mxu0 0.0
        %705 = vmatmul.mubr.f32.gmra.mrb[0].mxu0 %v595
        %v706 = vpop.f32.mrb[0].mxu0
        %v707 = vadd.f32 0.0, %v706
        %v708 = vpop.f32.mrb[0].mxu0
        %709 = vmatprep.mubr.f32.mxu0 0.0
        %710 = vmatmul.mubr.f32.gmra.mrb[0].mxu0 %v596
        %v711 = vpop.f32.mrb[0].mxu0
        %v712 = vadd.f32 0.0, %v711
        %v713 = vpop.f32.mrb[0].mxu0
        %714 = vmatprep.mubr.f32.mxu0 0.0
        %715 = vmatmul.mubr.f32.gmra.mrb[0].mxu0 %v597
        %v716 = vpop.f32.mrb[0].mxu0
        %v717 = vadd.f32 0.0, %v716
        %v718 = vpop.f32.mrb[0].mxu0
        %719 = vmatprep.mubr.f32.mxu0 0.0
        %720 = vmatmul.mubr.f32.gmra.mrb[0].mxu0 %v598
        %v721 = vpop.f32.mrb[0].mxu0
        %v722 = vadd.f32 0.0, %v721
        %v723 = vpop.f32.mrb[0].mxu0
        %724 = vmatprep.mubr.f32.mxu0 0.0
        %725 = vmatmul.mubr.f32.gmra.mrb[0].mxu0 %v599
        %v726 = vpop.f32.mrb[0].mxu0
        %v727 = vadd.f32 0.0, %v726
        %v728 = vpop.f32.mrb[0].mxu0
        %729 = vmatprep.mubr.f32.mxu0 0.0
        %730 = vmatmul.mubr.f32.gmra.mrb[0].mxu0 %v600
        %v731 = vpop.f32.mrb[0].mxu0
        %v732 = vadd.f32 0.0, %v731
        %v733 = vpop.f32.mrb[0].mxu0
        %734 = vmatprep.mubr.f32.mxu0 0.0
        %735 = vmatmul.mubr.f32.gmra.mrb[0].mxu0 %v601
        %v736 = vpop.f32.mrb[0].mxu0
        %v737 = vadd.f32 0.0, %v736
        %v738 = vpop.f32.mrb[0].mxu0
        %739 = vmatprep.mubr.f32.mxu0 0.0
        %740 = vmatmul.mubr.f32.gmra.mrb[0].mxu0 %v602
        %v741 = vpop.f32.mrb[0].mxu0
        %v742 = vadd.f32 0.0, %v741
        %v743 = vpop.f32.mrb[0].mxu0
        %744 = vmatprep.mubr.f32.mxu0 0.0
        %745 = vmatmul.mubr.f32.gmra.mrb[0].mxu0 %v603
        %v746 = vpop.f32.mrb[0].mxu0
        %v747 = vadd.f32 0.0, %v746
        %v748 = vpop.f32.mrb[0].mxu0
        %749 = vmatprep.mubr.f32.mxu0 0.0
        %750 = vmatmul.mubr.f32.gmra.mrb[0].mxu0 %v604
        %v751 = vpop.f32.mrb[0].mxu0
        %v752 = vadd.f32 0.0, %v751
        %v753 = vpop.f32.mrb[0].mxu0
        %754 = vmatprep.mubr.f32.mxu0 0.0
        %755 = vmatmul.mubr.f32.gmra.mrb[0].mxu0 %v605
        %v756 = vpop.f32.mrb[0].mxu0
        %v757 = vadd.f32 0.0, %v756
        %v758 = vpop.f32.mrb[0].mxu0
        %759 = vmatprep.mubr.f32.mxu0 0.0
        %760 = vmatmul.mubr.f32.gmra.mrb[0].mxu0 %v606
        %v761 = vpop.f32.mrb[0].mxu0
        %v762 = vadd.f32 0.0, %v761
        %v763 = vpop.f32.mrb[0].mxu0
        %764 = vmatprep.mubr.f32.mxu0 0.0
        %765 = vmatmul.mubr.f32.gmra.mrb[0].mxu0 %v607
        %v766 = vpop.f32.mrb[0].mxu0
        %v767 = vadd.f32 0.0, %v766
        %v768 = vpop.f32.mrb[0].mxu0
        %769 = vdwg.mxu0
        %v770 = vlaneseq
        %v771 = vshrl.u32 %v770, 7
        %v772 = vsub.s32 2, %v771
        %v773 = vrot.slane %v189, %v772
        %v774 = vadd.f32 %v692, %v773
        %v775 = vadd.f32 %v697, %v773
        %v776 = vadd.f32 %v702, %v773
        %v777 = vadd.f32 %v707, %v773
        %v778 = vadd.f32 %v712, %v773
        %v779 = vadd.f32 %v717, %v773
        %v780 = vadd.f32 %v722, %v773
        %v781 = vadd.f32 %v727, %v773
        %v782 = vadd.f32 %v732, %v773
        %v783 = vadd.f32 %v737, %v773
        %v784 = vadd.f32 %v742, %v773
        %v785 = vadd.f32 %v747, %v773
        %v786 = vadd.f32 %v752, %v773
        %v787 = vadd.f32 %v757, %v773
        %v788 = vadd.f32 %v762, %v773
        %v789 = vadd.f32 %v767, %v773
        %vm790 = vcmask 15360
        %791 = vst.msk [vmem:[%s187] sm:$0xff] %vm790, %v774
        %792 = vst.msk [vmem:[%s187 + $0x8] sm:$0xff] %vm790, %v775
        %793 = vst.msk [vmem:[%s187 + $0x10] sm:$0xff] %vm790, %v776
        %794 = vst.msk [vmem:[%s187 + $0x18] sm:$0xff] %vm790, %v777
        %795 = vst.msk [vmem:[%s187 + $0x20] sm:$0xff] %vm790, %v778
        %796 = vst.msk [vmem:[%s187 + $0x28] sm:$0xff] %vm790, %v779
        %797 = vst.msk [vmem:[%s187 + $0x30] sm:$0xff] %vm790, %v780
        %798 = vst.msk [vmem:[%s187 + $0x38] sm:$0xff] %vm790, %v781
        %799 = vst.msk [vmem:[%s187 + $0x40] sm:$0xff] %vm790, %v782
        %800 = vst.msk [vmem:[%s187 + $0x48] sm:$0xff] %vm790, %v783
        %801 = vst.msk [vmem:[%s187 + $0x50] sm:$0xff] %vm790, %v784
        %802 = vst.msk [vmem:[%s187 + $0x58] sm:$0xff] %vm790, %v785
        %803 = vst.msk [vmem:[%s187 + $0x60] sm:$0xff] %vm790, %v786
        %804 = vst.msk [vmem:[%s187 + $0x68] sm:$0xff] %vm790, %v787
        %805 = vst.msk [vmem:[%s187 + $0x70] sm:$0xff] %vm790, %v788
        %806 = vst.msk [vmem:[%s187 + $0x78] sm:$0xff] %vm790, %v789
        %s807 = smul.u32 16, %s15
        %p808 = scmp.lt.s32.totalorder %s807, 31
        %s809 = scalar_select %p808, %s807, 31
        %s810 = smul.addr %s809, 8
        %s811 = scalar_lea.vmem %s3, %s810
        // Predicated region
        $region37: #{tpu_custom_call.1} parent=31 // pred_check
          %p812 = pneg %p101
        $region38: #{tpu_custom_call.1} parent=31 // pred_check_branch
          %814 = sbr.rel (%p812) target = $region40
        $region39: #{tpu_custom_call.1} parent=31 // pred_region
          %s815 = smul.u32 16, %s15
        $region40: #{tpu_custom_call.1} parent=31 // pred_fallthru
          _
      $region32: #{tpu_custom_call.1} parent=5 // pred_fallthru
        _
      %p816 = scmp.le.s32.totalorder 2, %s10
      // Predicated region
      $region41: #{tpu_custom_call.1} parent=5 // pred_check
        %p817 = pneg %p816
      $region42: #{tpu_custom_call.1} parent=5 // pred_check_branch
        %819 = sbr.rel (%p817) target = $region44
      $region43: #{tpu_custom_call.1} parent=5 // pred_region
        %s820 = ssub.s32 %s10, 2
        // Predicated region
        $region45: #{tpu_custom_call.1} parent=43 // pred_check
          %p821 = pneg %p107
        $region46: #{tpu_custom_call.1} parent=43 // pred_check_branch
          %823 = sbr.rel (%p821) target = $region48
        $region47: #{tpu_custom_call.1} parent=43 // pred_region
          %s824 = smul.u32 16, %s16
          %p825 = scmp.lt.s32.totalorder %s824, 31
          %s826 = scalar_select %p825, %s824, 31
          %s827 = smul.addr %s826, 8
          %s828 = scalar_lea.vmem %s3, %s827
        $region48: #{tpu_custom_call.1} parent=43 // pred_fallthru
          _
      $region44: #{tpu_custom_call.1} parent=5 // pred_fallthru
        _
    $region6: #{tpu_custom_call.1} parent=1 // loop_footer
      %s14 = sadd.s32 1, %s10
    $region7: #{tpu_custom_call.1} parent=1 // loop_footer_branch
      %9 = sbr.rel target = $region3
    $region8: #{tpu_custom_call.1} parent=1 // loop_exit
      _
    %829 = vsyncpa [#allocation3], 1
    %s830 = scalar_lea.sflag [#allocation3], 1
    %831 = vsyncpa %s830, 1

</llo_original>
